<compile_context>
chip_gen: v7x
topology: tpu7x:2x2x1
jax: 0.10.0
libtpu: 0.0.40
codegen_flags: <defaults>
</compile_context>

<pallas_src>
import math

import jax
import jax.numpy as jnp
from jax.experimental import pallas as pl
from jax.experimental.pallas import tpu as pltpu

_LANES = 128


def _round_up(n, m):
    return ((n + m - 1) // m) * m


def _mlp_kernel(x_ref, w1_ref, w2_ref, o_ref):
    # x_ref : (B, K_pad)        VMEM  (flattened, lane-padded input)
    # w1_ref: (K_pad, N_pad)    VMEM  (pre-transposed + zero-padded fc1.weight)
    # w2_ref: (N_pad, OUT_pad)  VMEM  (pre-transposed + zero-padded fc2.weight)
    # o_ref : (B, OUT_pad)      VMEM  (lane-dense output; caller slices to out_sz)
    h = jnp.dot(x_ref[...], w1_ref[...], preferred_element_type=jnp.float32)
    h = jnp.maximum(h, 0.0)  # ReLU; padded hidden lanes are exactly 0
    o_ref[...] = jnp.dot(
        h, w2_ref[...], preferred_element_type=jnp.float32
    ).astype(o_ref.dtype)


def prepare_params(w1, w2):
    """One-time weight prep (call at init, NOT per forward).

    w1: (N, in_sz)   PyTorch fc1.weight layout
    w2: (out_sz, N)  PyTorch fc2.weight layout
    Returns pre-transposed, zero-padded, lane-dense weights:
      w1_p: (K_pad, N_pad)    with K_pad = ceil(in_sz/128)*128, N_pad = ceil(N/128)*128
      w2_p: (N_pad, OUT_pad)  with OUT_pad = ceil(out_sz/128)*128
    Zero padding is exact: padded x columns are 0, padded hidden lanes are
    ReLU(0)=0 and multiply zero rows of w2_p, padded output lanes come out 0.
    """
    N, in_sz = w1.shape
    out_sz = w2.shape[0]
    K_pad = _round_up(in_sz, _LANES)
    N_pad = _round_up(N, _LANES)
    OUT_pad = _round_up(out_sz, _LANES)

    w1_p = jnp.zeros((K_pad, N_pad), jnp.float32).at[:in_sz, :N].set(w1.T)
    w2_p = jnp.zeros((N_pad, OUT_pad), jnp.float32).at[:N, :out_sz].set(w2.T)
    return w1_p, w2_p


def ann_fc_forward(x_nchw, w1_p, w2_p, out_sz):
    """Forward pass of ANN_fc: relu(flatten(x) @ W1.T) @ W2.T.

    x_nchw: (B, C, H, W) float32
    w1_p, w2_p: outputs of prepare_params (already transposed + lane-padded)
    returns (B, out_sz) float32
    """
    B = x_nchw.shape[0]
    in_sz = math.prod(x_nchw.shape[1:])          # static Python, no device op
    K_pad, N_pad = w1_p.shape
    OUT_pad = w2_p.shape[1]

    x_flat = x_nchw.reshape(B, in_sz)            # nn.Flatten()
    if K_pad != in_sz:                           # pad reduction dim to lane width
        x_flat = jnp.pad(x_flat, ((0, 0), (0, K_pad - in_sz)))

    y_pad = pl.pallas_call(
        _mlp_kernel,
        out_shape=jax.ShapeDtypeStruct((B, OUT_pad), jnp.float32),
        grid_spec=pltpu.PrefetchScalarGridSpec(
            num_scalar_prefetch=0,
            grid=(1,),
            in_specs=[
                pl.BlockSpec((B, K_pad), lambda i: (0, 0)),
                pl.BlockSpec((K_pad, N_pad), lambda i: (0, 0)),
                pl.BlockSpec((N_pad, OUT_pad), lambda i: (0, 0)),
            ],
            out_specs=pl.BlockSpec((B, OUT_pad), lambda i: (0, 0)),
        ),
        compiler_params=pltpu.CompilerParams(
            dimension_semantics=("arbitrary",),
        ),
    )(x_flat, w1_p, w2_p)

    return y_pad[:, :out_sz]                     # drop zero-padded output lanes


if __name__ == "__main__":
    # Shapes consistent with the module: x = [2, 4, 16, 16] -> in_sz = 1024,
    # hidden N = 32, out_sz = 10.
    B, C, H, W = 2, 4, 16, 16
    in_sz = C * H * W
    N = 32
    out_sz = 10

    key = jax.random.PRNGKey(0)
    kx, k1, k2 = jax.random.split(key, 3)

    x = jax.random.normal(kx, (B, C, H, W), dtype=jnp.float32)

    # Deterministic parameter init (PyTorch-Linear-style uniform bounds).
    bound1 = 1.0 / (in_sz ** 0.5)
    bound2 = 1.0 / (N ** 0.5)
    w1 = jax.random.uniform(k1, (N, in_sz), minval=-bound1, maxval=bound1,
                            dtype=jnp.float32)   # fc1.weight
    w2 = jax.random.uniform(k2, (out_sz, N), minval=-bound2, maxval=bound2,
                            dtype=jnp.float32)   # fc2.weight

    # One-time parameter prep (transpose + lane padding) — amortized across calls.
    w1_p, w2_p = jax.block_until_ready(prepare_params(w1, w2))

    y = ann_fc_forward(x, w1_p, w2_p, out_sz)
    y = jax.block_until_ready(y)

    # Reference check in plain JAX (same math as the PyTorch forward).
    x_flat = x.reshape(B, in_sz)
    y_ref = jnp.maximum(x_flat @ w1.T, 0.0) @ w2.T
    assert y.shape == (B, out_sz)
    assert jnp.allclose(y, y_ref, atol=1e-4, rtol=1e-4)

    print("KERNEL_OK")
</pallas_src>

<mosaic_0001>
module attributes {stable_mosaic.version = 11 : i64} {
  func.func @_mlp_kernel(%arg0: i32, %arg1: memref<2x1024xf32, #tpu.memory_space<vmem>>, %arg2: memref<1024x128xf32, #tpu.memory_space<vmem>>, %arg3: memref<128x128xf32, #tpu.memory_space<vmem>>, %arg4: memref<2x128xf32, #tpu.memory_space<vmem>>) attributes {dimension_semantics = [#tpu.dimension_semantics<arbitrary>], iteration_bounds = array<i64: 1>, scalar_prefetch = 0 : i64, scratch_operands = 0 : i64, tpu.core_type = #tpu.core_type<tc>, window_params = [{pipeline_mode = #tpu.pipeline_mode<synchronous>, transform_indices = @transform_0, window_bounds = array<i64: 2, 1024>}, {pipeline_mode = #tpu.pipeline_mode<synchronous>, transform_indices = @transform_1, window_bounds = array<i64: 1024, 128>}, {pipeline_mode = #tpu.pipeline_mode<synchronous>, transform_indices = @transform_2, window_bounds = array<i64: 128, 128>}, {pipeline_mode = #tpu.pipeline_mode<synchronous>, transform_indices = @transform_3, window_bounds = array<i64: 2, 128>}]} {
    %c0 = arith.constant 0 : index
    %c0_0 = arith.constant 0 : index
    %0 = vector.load %arg1[%c0, %c0_0] : memref<2x1024xf32, #tpu.memory_space<vmem>>, vector<2x1024xf32>
    %c0_1 = arith.constant 0 : index
    %c0_2 = arith.constant 0 : index
    %1 = vector.load %arg2[%c0_1, %c0_2] : memref<1024x128xf32, #tpu.memory_space<vmem>>, vector<1024x128xf32>
    %cst = arith.constant dense<0.000000e+00> : vector<2x128xf32>
    %2 = tpu.matmul %0, %1, %cst {dimension_numbers = #tpu.dot_dimension_numbers<[1], [0], [0], [1], [0, 0, 1, 1], [], []>} : vector<2x1024xf32>, vector<1024x128xf32>, vector<2x128xf32> -> vector<2x128xf32>
    %cst_3 = arith.constant 0.000000e+00 : f32
    %3 = vector.broadcast %cst_3 : f32 to vector<2x128xf32>
    %4 = arith.maximumf %2, %3 : vector<2x128xf32>
    %c0_4 = arith.constant 0 : index
    %c0_5 = arith.constant 0 : index
    %5 = vector.load %arg3[%c0_4, %c0_5] : memref<128x128xf32, #tpu.memory_space<vmem>>, vector<128x128xf32>
    %cst_6 = arith.constant dense<0.000000e+00> : vector<2x128xf32>
    %6 = tpu.matmul %4, %5, %cst_6 {dimension_numbers = #tpu.dot_dimension_numbers<[1], [0], [0], [1], [0, 0, 1, 1], [], []>} : vector<2x128xf32>, vector<128x128xf32>, vector<2x128xf32> -> vector<2x128xf32>
    %c0_7 = arith.constant 0 : index
    %c0_8 = arith.constant 0 : index
    %7 = vector.load %arg4[%c0_7, %c0_8] : memref<2x128xf32, #tpu.memory_space<vmem>>, vector<2x128xf32>
    tpu.vector_store %arg4[%c0_7, %c0_8], %6 {strides = array<i32>} : memref<2x128xf32, #tpu.memory_space<vmem>>, vector<2x128xf32>,
    return
  }
  func.func @transform_0(%arg0: i32) -> (i32, i32) {
    %c0_i32 = arith.constant 0 : i32
    %c0_i32_0 = arith.constant 0 : i32
    %c0_i32_1 = arith.constant 0 : i32
    return %c0_i32, %c0_i32_0 : i32, i32
  }
  func.func @transform_1(%arg0: i32) -> (i32, i32) {
    %c0_i32 = arith.constant 0 : i32
    %c0_i32_0 = arith.constant 0 : i32
    %c0_i32_1 = arith.constant 0 : i32
    return %c0_i32, %c0_i32_0 : i32, i32
  }
  func.func @transform_2(%arg0: i32) -> (i32, i32) {
    %c0_i32 = arith.constant 0 : i32
    %c0_i32_0 = arith.constant 0 : i32
    %c0_i32_1 = arith.constant 0 : i32
    return %c0_i32, %c0_i32_0 : i32, i32
  }
  func.func @transform_3(%arg0: i32) -> (i32, i32) {
    %c0_i32 = arith.constant 0 : i32
    %c0_i32_0 = arith.constant 0 : i32
    %c0_i32_1 = arith.constant 0 : i32
    return %c0_i32, %c0_i32_0 : i32, i32
  }
}

</mosaic_0001>

<llo_original>
// kernel: tpu_custom_call.1
$region0: #{tpu_custom_call.1}
  #allocation0 [shape = 'u32[]', space=smem, size = 0x4, offset = 0x4, fixed_abs, tag = 'smem constant byte address 0x4 - core index']
  #allocation1 [shape = 'u32[144,128]{1,0:T(1,128)}', space=vmem, size = 0x12000, scoped, tag = 'internal scratch']
  %s0 = inlined_call_operand.hbm [shape: f32[2,1024], index: 0, kind: input, shape index: {}]
  %s1 = inlined_call_operand.hbm [shape: f32[1024,128], index: 1, kind: input, shape index: {}]
  %s2 = inlined_call_operand.hbm [shape: f32[128,128], index: 2, kind: input, shape index: {}]
  %s3 = inlined_call_operand.hbm [shape: f32[2,128], index: 3, kind: output, shape index: {}]
  %s4 = sld [smem:[#allocation0]]
  $region34: #{tpu_custom_call.1} parent=0
    _
  %s6 = ssub.s32 1, %s4
  %s7 = scalar_select 0, %s6, %s4
  $region1: #{tpu_custom_call.1} parent=0
    #allocation2 [shape = 'u8[8192]{0}', space=vmem, size = 0x2000, scoped, tag = 'input window, operand 0, single buffered']
    #allocation3 [shape = 's32[1]{0}', space=sflag, size = 0x4, scoped, tag = 'scoped memory for tpu_custom_call.1']
    #allocation4 [shape = 's32[1]{0}', space=sflag, size = 0x4, scoped, tag = 'scoped memory for tpu_custom_call.1']
    #allocation5 [shape = 'u8[524288]{0}', space=vmem, size = 0x80000, scoped, tag = 'input window, operand 1, single buffered']
    #allocation6 [shape = 's32[1]{0}', space=sflag, size = 0x4, scoped, tag = 'scoped memory for tpu_custom_call.1']
    #allocation7 [shape = 'u8[65536]{0}', space=vmem, size = 0x10000, scoped, tag = 'input window, operand 2, single buffered']
    #allocation8 [shape = 'u8[1024]{0}', space=vmem, size = 0x400, scoped, tag = 'output window, operand 0, single buffered']
    %8 = vsyncpa [#allocation3], 0
    %9 = vsyncpa [#allocation6], 0
    %10 = vsyncpa [#allocation4], 0
    // Predicated region
    $region2: #{tpu_custom_call.1} parent=1 // pred_check
      _
    $region3: #{tpu_custom_call.1} parent=1 // pred_check_branch
      %12 = sbr.rel (0) target = $region5
    $region4: #{tpu_custom_call.1} parent=1 // pred_region
      %s14 = ssub.s32 256, 256
      %15 = vsyncadd [#allocation3], %s14
      %s17 = sshll.u32 [#allocation2], 4
      %s18 = int_to_ptr.vmem [resolvable:$true] %s17
      %20 = dma.hbm_to_vmem [thread:$0]  %s0, 256, %s18, [#allocation3]
    $region5: #{tpu_custom_call.1} parent=1 // pred_fallthru
      _
    // Predicated region
    $region6: #{tpu_custom_call.1} parent=1 // pred_check
      _
    $region7: #{tpu_custom_call.1} parent=1 // pred_check_branch
      %22 = sbr.rel (0) target = $region9
    $region8: #{tpu_custom_call.1} parent=1 // pred_region
      %s24 = ssub.s32 16384, 16384
      %25 = vsyncadd [#allocation6], %s24
      %s26 = sshll.u32 [#allocation5], 4
      %s27 = int_to_ptr.vmem [resolvable:$true] %s26
      %32 = dma.hbm_to_vmem [thread:$0]  %s1, 16384, %s27, [#allocation6], 128, 128, 8
    $region9: #{tpu_custom_call.1} parent=1 // pred_fallthru
      _
    // Predicated region
    $region10: #{tpu_custom_call.1} parent=1 // pred_check
      _
    $region11: #{tpu_custom_call.1} parent=1 // pred_check_branch
      %34 = sbr.rel (0) target = $region13
    $region12: #{tpu_custom_call.1} parent=1 // pred_region
      %s36 = ssub.s32 2048, 2048
      %37 = vsyncadd [#allocation6], %s36
      %s38 = sshll.u32 [#allocation7], 4
      %s39 = int_to_ptr.vmem [resolvable:$true] %s38
      %44 = dma.hbm_to_vmem [thread:$0]  %s2, 2048, %s39, [#allocation6], 128, 128, 8
    $region13: #{tpu_custom_call.1} parent=1 // pred_fallthru
      _
    // Predicated region
    $region14: #{tpu_custom_call.1} parent=1 // pred_check
      _
    $region15: #{tpu_custom_call.1} parent=1 // pred_check_branch
      %46 = sbr.rel (0) target = $region17
    $region16: #{tpu_custom_call.1} parent=1 // pred_region
      %47 = dma.done [#allocation3], 256
    $region17: #{tpu_custom_call.1} parent=1 // pred_fallthru
      _
    // Predicated region
    $region18: #{tpu_custom_call.1} parent=1 // pred_check
      _
    $region19: #{tpu_custom_call.1} parent=1 // pred_check_branch
      %49 = sbr.rel (0) target = $region21
    $region20: #{tpu_custom_call.1} parent=1 // pred_region
      %50 = dma.done [#allocation6], 16384
    $region21: #{tpu_custom_call.1} parent=1 // pred_fallthru
      _
    // Predicated region
    $region22: #{tpu_custom_call.1} parent=1 // pred_check
      _
    $region23: #{tpu_custom_call.1} parent=1 // pred_check_branch
      %52 = sbr.rel (0) target = $region25
    $region24: #{tpu_custom_call.1} parent=1 // pred_region
      %53 = dma.done [#allocation6], 2048
    $region25: #{tpu_custom_call.1} parent=1 // pred_fallthru
      _
    %v54 = vld [vmem:[#allocation2] sm:$0xff]
    %v55 = vld [vmem:[#allocation2 + $0x8] sm:$0xff]
    %v56 = vld [vmem:[#allocation5] sm:$0xff]
    %v57 = vld [vmem:[#allocation5 + $0x8] sm:$0xff]
    %v58 = vld [vmem:[#allocation5 + $0x10] sm:$0xff]
    %v59 = vld [vmem:[#allocation5 + $0x18] sm:$0xff]
    %v60 = vld [vmem:[#allocation5 + $0x20] sm:$0xff]
    %v61 = vld [vmem:[#allocation5 + $0x28] sm:$0xff]
    %v62 = vld [vmem:[#allocation5 + $0x30] sm:$0xff]
    %v63 = vld [vmem:[#allocation5 + $0x38] sm:$0xff]
    %v64 = vld [vmem:[#allocation5 + $0x40] sm:$0xff]
    %v65 = vld [vmem:[#allocation5 + $0x48] sm:$0xff]
    %v66 = vld [vmem:[#allocation5 + $0x50] sm:$0xff]
    %v67 = vld [vmem:[#allocation5 + $0x58] sm:$0xff]
    %v68 = vld [vmem:[#allocation5 + $0x60] sm:$0xff]
    %v69 = vld [vmem:[#allocation5 + $0x68] sm:$0xff]
    %v70 = vld [vmem:[#allocation5 + $0x70] sm:$0xff]
    %v71 = vld [vmem:[#allocation5 + $0x78] sm:$0xff]
    %v72 = vld [vmem:[#allocation5 + $0x80] sm:$0xff]
    %v73 = vld [vmem:[#allocation5 + $0x88] sm:$0xff]
    %v74 = vld [vmem:[#allocation5 + $0x90] sm:$0xff]
    %v75 = vld [vmem:[#allocation5 + $0x98] sm:$0xff]
    %v76 = vld [vmem:[#allocation5 + $0xa0] sm:$0xff]
    %v77 = vld [vmem:[#allocation5 + $0xa8] sm:$0xff]
    %v78 = vld [vmem:[#allocation5 + $0xb0] sm:$0xff]
    %v79 = vld [vmem:[#allocation5 + $0xb8] sm:$0xff]
    %v80 = vld [vmem:[#allocation5 + $0xc0] sm:$0xff]
    %v81 = vld [vmem:[#allocation5 + $0xc8] sm:$0xff]
    %v82 = vld [vmem:[#allocation5 + $0xd0] sm:$0xff]
    %v83 = vld [vmem:[#allocation5 + $0xd8] sm:$0xff]
    %v84 = vld [vmem:[#allocation5 + $0xe0] sm:$0xff]
    %v85 = vld [vmem:[#allocation5 + $0xe8] sm:$0xff]
    %v86 = vld [vmem:[#allocation5 + $0xf0] sm:$0xff]
    %v87 = vld [vmem:[#allocation5 + $0xf8] sm:$0xff]
    %v88 = vld [vmem:[#allocation5 + $0x100] sm:$0xff]
    %v89 = vld [vmem:[#allocation5 + $0x108] sm:$0xff]
    %v90 = vld [vmem:[#allocation5 + $0x110] sm:$0xff]
    %v91 = vld [vmem:[#allocation5 + $0x118] sm:$0xff]
    %v92 = vld [vmem:[#allocation5 + $0x120] sm:$0xff]
    %v93 = vld [vmem:[#allocation5 + $0x128] sm:$0xff]
    %v94 = vld [vmem:[#allocation5 + $0x130] sm:$0xff]
    %v95 = vld [vmem:[#allocation5 + $0x138] sm:$0xff]
    %v96 = vld [vmem:[#allocation5 + $0x140] sm:$0xff]
    %v97 = vld [vmem:[#allocation5 + $0x148] sm:$0xff]
    %v98 = vld [vmem:[#allocation5 + $0x150] sm:$0xff]
    %v99 = vld [vmem:[#allocation5 + $0x158] sm:$0xff]
    %v100 = vld [vmem:[#allocation5 + $0x160] sm:$0xff]
    %v101 = vld [vmem:[#allocation5 + $0x168] sm:$0xff]
    %v102 = vld [vmem:[#allocation5 + $0x170] sm:$0xff]
    %v103 = vld [vmem:[#allocation5 + $0x178] sm:$0xff]
    %v104 = vld [vmem:[#allocation5 + $0x180] sm:$0xff]
    %v105 = vld [vmem:[#allocation5 + $0x188] sm:$0xff]
    %v106 = vld [vmem:[#allocation5 + $0x190] sm:$0xff]
    %v107 = vld [vmem:[#allocation5 + $0x198] sm:$0xff]
    %v108 = vld [vmem:[#allocation5 + $0x1a0] sm:$0xff]
    %v109 = vld [vmem:[#allocation5 + $0x1a8] sm:$0xff]
    %v110 = vld [vmem:[#allocation5 + $0x1b0] sm:$0xff]
    %v111 = vld [vmem:[#allocation5 + $0x1b8] sm:$0xff]
    %v112 = vld [vmem:[#allocation5 + $0x1c0] sm:$0xff]
    %v113 = vld [vmem:[#allocation5 + $0x1c8] sm:$0xff]
    %v114 = vld [vmem:[#allocation5 + $0x1d0] sm:$0xff]
    %v115 = vld [vmem:[#allocation5 + $0x1d8] sm:$0xff]
    %v116 = vld [vmem:[#allocation5 + $0x1e0] sm:$0xff]
    %v117 = vld [vmem:[#allocation5 + $0x1e8] sm:$0xff]
    %v118 = vld [vmem:[#allocation5 + $0x1f0] sm:$0xff]
    %v119 = vld [vmem:[#allocation5 + $0x1f8] sm:$0xff]
    %v120 = vld [vmem:[#allocation5 + $0x200] sm:$0xff]
    %v121 = vld [vmem:[#allocation5 + $0x208] sm:$0xff]
    %v122 = vld [vmem:[#allocation5 + $0x210] sm:$0xff]
    %v123 = vld [vmem:[#allocation5 + $0x218] sm:$0xff]
    %v124 = vld [vmem:[#allocation5 + $0x220] sm:$0xff]
    %v125 = vld [vmem:[#allocation5 + $0x228] sm:$0xff]
    %v126 = vld [vmem:[#allocation5 + $0x230] sm:$0xff]
    %v127 = vld [vmem:[#allocation5 + $0x238] sm:$0xff]
    %v128 = vld [vmem:[#allocation5 + $0x240] sm:$0xff]
    %v129 = vld [vmem:[#allocation5 + $0x248] sm:$0xff]
    %v130 = vld [vmem:[#allocation5 + $0x250] sm:$0xff]
    %v131 = vld [vmem:[#allocation5 + $0x258] sm:$0xff]
    %v132 = vld [vmem:[#allocation5 + $0x260] sm:$0xff]
    %v133 = vld [vmem:[#allocation5 + $0x268] sm:$0xff]
    %v134 = vld [vmem:[#allocation5 + $0x270] sm:$0xff]
    %v135 = vld [vmem:[#allocation5 + $0x278] sm:$0xff]
    %v136 = vld [vmem:[#allocation5 + $0x280] sm:$0xff]
    %v137 = vld [vmem:[#allocation5 + $0x288] sm:$0xff]
    %v138 = vld [vmem:[#allocation5 + $0x290] sm:$0xff]
    %v139 = vld [vmem:[#allocation5 + $0x298] sm:$0xff]
    %v140 = vld [vmem:[#allocation5 + $0x2a0] sm:$0xff]
    %v141 = vld [vmem:[#allocation5 + $0x2a8] sm:$0xff]
    %v142 = vld [vmem:[#allocation5 + $0x2b0] sm:$0xff]
    %v143 = vld [vmem:[#allocation5 + $0x2b8] sm:$0xff]
    %v144 = vld [vmem:[#allocation5 + $0x2c0] sm:$0xff]
    %v145 = vld [vmem:[#allocation5 + $0x2c8] sm:$0xff]
    %v146 = vld [vmem:[#allocation5 + $0x2d0] sm:$0xff]
    %v147 = vld [vmem:[#allocation5 + $0x2d8] sm:$0xff]
    %v148 = vld [vmem:[#allocation5 + $0x2e0] sm:$0xff]
    %v149 = vld [vmem:[#allocation5 + $0x2e8] sm:$0xff]
    %v150 = vld [vmem:[#allocation5 + $0x2f0] sm:$0xff]
    %v151 = vld [vmem:[#allocation5 + $0x2f8] sm:$0xff]
    %v152 = vld [vmem:[#allocation5 + $0x300] sm:$0xff]
    %v153 = vld [vmem:[#allocation5 + $0x308] sm:$0xff]
    %v154 = vld [vmem:[#allocation5 + $0x310] sm:$0xff]
    %v155 = vld [vmem:[#allocation5 + $0x318] sm:$0xff]
    %v156 = vld [vmem:[#allocation5 + $0x320] sm:$0xff]
    %v157 = vld [vmem:[#allocation5 + $0x328] sm:$0xff]
    %v158 = vld [vmem:[#allocation5 + $0x330] sm:$0xff]
    %v159 = vld [vmem:[#allocation5 + $0x338] sm:$0xff]
    %v160 = vld [vmem:[#allocation5 + $0x340] sm:$0xff]
    %v161 = vld [vmem:[#allocation5 + $0x348] sm:$0xff]
    %v162 = vld [vmem:[#allocation5 + $0x350] sm:$0xff]
    %v163 = vld [vmem:[#allocation5 + $0x358] sm:$0xff]
    %v164 = vld [vmem:[#allocation5 + $0x360] sm:$0xff]
    %v165 = vld [vmem:[#allocation5 + $0x368] sm:$0xff]
    %v166 = vld [vmem:[#allocation5 + $0x370] sm:$0xff]
    %v167 = vld [vmem:[#allocation5 + $0x378] sm:$0xff]
    %v168 = vld [vmem:[#allocation5 + $0x380] sm:$0xff]
    %v169 = vld [vmem:[#allocation5 + $0x388] sm:$0xff]
    %v170 = vld [vmem:[#allocation5 + $0x390] sm:$0xff]
    %v171 = vld [vmem:[#allocation5 + $0x398] sm:$0xff]
    %v172 = vld [vmem:[#allocation5 + $0x3a0] sm:$0xff]
    %v173 = vld [vmem:[#allocation5 + $0x3a8] sm:$0xff]
    %v174 = vld [vmem:[#allocation5 + $0x3b0] sm:$0xff]
    %v175 = vld [vmem:[#allocation5 + $0x3b8] sm:$0xff]
    %v176 = vld [vmem:[#allocation5 + $0x3c0] sm:$0xff]
    %v177 = vld [vmem:[#allocation5 + $0x3c8] sm:$0xff]
    %v178 = vld [vmem:[#allocation5 + $0x3d0] sm:$0xff]
    %v179 = vld [vmem:[#allocation5 + $0x3d8] sm:$0xff]
    %v180 = vld [vmem:[#allocation5 + $0x3e0] sm:$0xff]
    %v181 = vld [vmem:[#allocation5 + $0x3e8] sm:$0xff]
    %v182 = vld [vmem:[#allocation5 + $0x3f0] sm:$0xff]
    %v183 = vld [vmem:[#allocation5 + $0x3f8] sm:$0xff]
    %v186 = vcombine.high %v54, %v54
    %v188 = vunpack.c.l.s4 1983009808
    %v189 = vunpack.c.0.s8 %v188
    %v190 = vlaneseq
    %v191 = vshrl.u32 %v190, 7
    %v192 = vsub.s32 %v189, %v191
    %v193 = vrot.slane %v54, %v192
    %v195 = vunpack.c.l.s4 1983009808
    %v196 = vunpack.c.0.s8 %v195
    %v197 = vlaneseq
    %v198 = vshrl.u32 %v197, 7
    %v199 = vsub.s32 %v196, %v198
    %v200 = vrot.slane %v186, %v199
    %v201 = vcombine.high %v193, %v193
    %v202 = vcombine.high %v200, %v200
    %v203 = vcombine.high %v55, %v55
    %v205 = vunpack.c.l.s4 1983009808
    %v206 = vunpack.c.0.s8 %v205
    %v207 = vlaneseq
    %v208 = vshrl.u32 %v207, 7
    %v209 = vsub.s32 %v206, %v208
    %v210 = vrot.slane %v55, %v209
    %v212 = vunpack.c.l.s4 1983009808
    %v213 = vunpack.c.0.s8 %v212
    %v214 = vlaneseq
    %v215 = vshrl.u32 %v214, 7
    %v216 = vsub.s32 %v213, %v215
    %v217 = vrot.slane %v203, %v216
    %v218 = vcombine.high %v210, %v210
    %v219 = vcombine.high %v217, %v217
    %228 = vmatprep.subr.mxu0 0.0
    %229 = vmatpush1.msra.mxu0 %v56
    %230 = vmatprep.subr.mxu0 0.0
    %231 = vmatpush1.msra.mxu0 %v57
    %232 = vmatprep.subr.mxu0 0.0
    %233 = vmatpush1.msra.mxu0 %v58
    %234 = vmatprep.subr.mxu0 0.0
    %235 = vmatpush1.msra.mxu0 %v59
    %236 = vmatprep.subr.mxu0 0.0
    %237 = vmatpush1.msra.mxu0 %v60
    %238 = vmatprep.subr.mxu0 0.0
    %239 = vmatpush1.msra.mxu0 %v61
    %240 = vmatprep.subr.mxu0 0.0
    %241 = vmatpush1.msra.mxu0 %v62
    %242 = vmatprep.subr.mxu0 0.0
    %243 = vmatpush1.msra.mxu0 %v63
    %244 = vmatprep.subr.mxu0 0.0
    %245 = vmatpush1.msra.mxu0 %v64
    %246 = vmatprep.subr.mxu0 0.0
    %247 = vmatpush1.msra.mxu0 %v65
    %248 = vmatprep.subr.mxu0 0.0
    %249 = vmatpush1.msra.mxu0 %v66
    %250 = vmatprep.subr.mxu0 0.0
    %251 = vmatpush1.msra.mxu0 %v67
    %252 = vmatprep.subr.mxu0 0.0
    %253 = vmatpush1.msra.mxu0 %v68
    %254 = vmatprep.subr.mxu0 0.0
    %255 = vmatpush1.msra.mxu0 %v69
    %256 = vmatprep.subr.mxu0 0.0
    %257 = vmatpush1.msra.mxu0 %v70
    %258 = vmatprep.subr.mxu0 0.0
    %259 = vmatpush1.msra.mxu0 %v71
    %260 = vmatprep.subr.mxu0 0.0
    %261 = vmatpush1.msra.mxu0 %v72
    %262 = vmatprep.subr.mxu0 0.0
    %263 = vmatpush1.msra.mxu0 %v73
    %264 = vmatprep.subr.mxu0 0.0
    %265 = vmatpush1.msra.mxu0 %v74
    %266 = vmatprep.subr.mxu0 0.0
    %267 = vmatpush1.msra.mxu0 %v75
    %268 = vmatprep.subr.mxu0 0.0
    %269 = vmatpush1.msra.mxu0 %v76
    %270 = vmatprep.subr.mxu0 0.0
    %271 = vmatpush1.msra.mxu0 %v77
    %272 = vmatprep.subr.mxu0 0.0
    %273 = vmatpush1.msra.mxu0 %v78
    %274 = vmatprep.subr.mxu0 0.0
    %275 = vmatpush1.msra.mxu0 %v79
    %276 = vmatprep.subr.mxu0 0.0
    %277 = vmatpush1.msra.mxu0 %v80
    %278 = vmatprep.subr.mxu0 0.0
    %279 = vmatpush1.msra.mxu0 %v81
    %280 = vmatprep.subr.mxu0 0.0
    %281 = vmatpush1.msra.mxu0 %v82
    %282 = vmatprep.subr.mxu0 0.0
    %283 = vmatpush1.msra.mxu0 %v83
    %284 = vmatprep.subr.mxu0 0.0
    %285 = vmatpush1.msra.mxu0 %v84
    %286 = vmatprep.subr.mxu0 0.0
    %287 = vmatpush1.msra.mxu0 %v85
    %288 = vmatprep.subr.mxu0 0.0
    %289 = vmatpush1.msra.mxu0 %v86
    %290 = vmatprep.subr.mxu0 0.0
    %291 = vmatpush1.msra.mxu0 %v87
    %292 = vmatprep.mubr.f32.mxu0 %v201
    %293 = vmatmul.mubr.f32.gmra.mrb[0].mxu0 %v193
    %v294 = vpop.f32.mrb[0].mxu0
    %v295 = vadd.f32 0.0, %v294
    %v296 = vpop.f32.mrb[0].mxu0
    %297 = vdwg.mxu0
    %298 = vmatprep.subr.mxu0 0.0
    %299 = vmatpush1.msra.mxu0 %v88
    %300 = vmatprep.subr.mxu0 0.0
    %301 = vmatpush1.msra.mxu0 %v89
    %302 = vmatprep.subr.mxu0 0.0
    %303 = vmatpush1.msra.mxu0 %v90
    %304 = vmatprep.subr.mxu0 0.0
    %305 = vmatpush1.msra.mxu0 %v91
    %306 = vmatprep.subr.mxu0 0.0
    %307 = vmatpush1.msra.mxu0 %v92
    %308 = vmatprep.subr.mxu0 0.0
    %309 = vmatpush1.msra.mxu0 %v93
    %310 = vmatprep.subr.mxu0 0.0
    %311 = vmatpush1.msra.mxu0 %v94
    %312 = vmatprep.subr.mxu0 0.0
    %313 = vmatpush1.msra.mxu0 %v95
    %314 = vmatprep.subr.mxu0 0.0
    %315 = vmatpush1.msra.mxu0 %v96
    %316 = vmatprep.subr.mxu0 0.0
    %317 = vmatpush1.msra.mxu0 %v97
    %318 = vmatprep.subr.mxu0 0.0
    %319 = vmatpush1.msra.mxu0 %v98
    %320 = vmatprep.subr.mxu0 0.0
    %321 = vmatpush1.msra.mxu0 %v99
    %322 = vmatprep.subr.mxu0 0.0
    %323 = vmatpush1.msra.mxu0 %v100
    %324 = vmatprep.subr.mxu0 0.0
    %325 = vmatpush1.msra.mxu0 %v101
    %326 = vmatprep.subr.mxu0 0.0
    %327 = vmatpush1.msra.mxu0 %v102
    %328 = vmatprep.subr.mxu0 0.0
    %329 = vmatpush1.msra.mxu0 %v103
    %330 = vmatprep.subr.mxu0 0.0
    %331 = vmatpush1.msra.mxu0 %v104
    %332 = vmatprep.subr.mxu0 0.0
    %333 = vmatpush1.msra.mxu0 %v105
    %334 = vmatprep.subr.mxu0 0.0
    %335 = vmatpush1.msra.mxu0 %v106
    %336 = vmatprep.subr.mxu0 0.0
    %337 = vmatpush1.msra.mxu0 %v107
    %338 = vmatprep.subr.mxu0 0.0
    %339 = vmatpush1.msra.mxu0 %v108
    %340 = vmatprep.subr.mxu0 0.0
    %341 = vmatpush1.msra.mxu0 %v109
    %342 = vmatprep.subr.mxu0 0.0
    %343 = vmatpush1.msra.mxu0 %v110
    %344 = vmatprep.subr.mxu0 0.0
    %345 = vmatpush1.msra.mxu0 %v111
    %346 = vmatprep.subr.mxu0 0.0
    %347 = vmatpush1.msra.mxu0 %v112
    %348 = vmatprep.subr.mxu0 0.0
    %349 = vmatpush1.msra.mxu0 %v113
    %350 = vmatprep.subr.mxu0 0.0
    %351 = vmatpush1.msra.mxu0 %v114
    %352 = vmatprep.subr.mxu0 0.0
    %353 = vmatpush1.msra.mxu0 %v115
    %354 = vmatprep.subr.mxu0 0.0
    %355 = vmatpush1.msra.mxu0 %v116
    %356 = vmatprep.subr.mxu0 0.0
    %357 = vmatpush1.msra.mxu0 %v117
    %358 = vmatprep.subr.mxu0 0.0
    %359 = vmatpush1.msra.mxu0 %v118
    %360 = vmatprep.subr.mxu0 0.0
    %361 = vmatpush1.msra.mxu0 %v119
    %362 = vmatprep.mubr.f32.mxu0 %v202
    %363 = vmatmul.mubr.f32.gmra.mrb[0].mxu0 %v200
    %v364 = vpop.f32.mrb[0].mxu0
    %v365 = vadd.f32 %v295, %v364
    %v366 = vpop.f32.mrb[0].mxu0
    %367 = vdwg.mxu0
    %368 = vmatprep.subr.mxu0 0.0
    %369 = vmatpush1.msra.mxu0 %v120
    %370 = vmatprep.subr.mxu0 0.0
    %371 = vmatpush1.msra.mxu0 %v121
    %372 = vmatprep.subr.mxu0 0.0
    %373 = vmatpush1.msra.mxu0 %v122
    %374 = vmatprep.subr.mxu0 0.0
    %375 = vmatpush1.msra.mxu0 %v123
    %376 = vmatprep.subr.mxu0 0.0
    %377 = vmatpush1.msra.mxu0 %v124
    %378 = vmatprep.subr.mxu0 0.0
    %379 = vmatpush1.msra.mxu0 %v125
    %380 = vmatprep.subr.mxu0 0.0
    %381 = vmatpush1.msra.mxu0 %v126
    %382 = vmatprep.subr.mxu0 0.0
    %383 = vmatpush1.msra.mxu0 %v127
    %384 = vmatprep.subr.mxu0 0.0
    %385 = vmatpush1.msra.mxu0 %v128
    %386 = vmatprep.subr.mxu0 0.0
    %387 = vmatpush1.msra.mxu0 %v129
    %388 = vmatprep.subr.mxu0 0.0
    %389 = vmatpush1.msra.mxu0 %v130
    %390 = vmatprep.subr.mxu0 0.0
    %391 = vmatpush1.msra.mxu0 %v131
    %392 = vmatprep.subr.mxu0 0.0
    %393 = vmatpush1.msra.mxu0 %v132
    %394 = vmatprep.subr.mxu0 0.0
    %395 = vmatpush1.msra.mxu0 %v133
    %396 = vmatprep.subr.mxu0 0.0
    %397 = vmatpush1.msra.mxu0 %v134
    %398 = vmatprep.subr.mxu0 0.0
    %399 = vmatpush1.msra.mxu0 %v135
    %400 = vmatprep.subr.mxu0 0.0
    %401 = vmatpush1.msra.mxu0 %v136
    %402 = vmatprep.subr.mxu0 0.0
    %403 = vmatpush1.msra.mxu0 %v137
    %404 = vmatprep.subr.mxu0 0.0
    %405 = vmatpush1.msra.mxu0 %v138
    %406 = vmatprep.subr.mxu0 0.0
    %407 = vmatpush1.msra.mxu0 %v139
    %408 = vmatprep.subr.mxu0 0.0
    %409 = vmatpush1.msra.mxu0 %v140
    %410 = vmatprep.subr.mxu0 0.0
    %411 = vmatpush1.msra.mxu0 %v141
    %412 = vmatprep.subr.mxu0 0.0
    %413 = vmatpush1.msra.mxu0 %v142
    %414 = vmatprep.subr.mxu0 0.0
    %415 = vmatpush1.msra.mxu0 %v143
    %416 = vmatprep.subr.mxu0 0.0
    %417 = vmatpush1.msra.mxu0 %v144
    %418 = vmatprep.subr.mxu0 0.0
    %419 = vmatpush1.msra.mxu0 %v145
    %420 = vmatprep.subr.mxu0 0.0
    %421 = vmatpush1.msra.mxu0 %v146
    %422 = vmatprep.subr.mxu0 0.0
    %423 = vmatpush1.msra.mxu0 %v147
    %424 = vmatprep.subr.mxu0 0.0
    %425 = vmatpush1.msra.mxu0 %v148
    %426 = vmatprep.subr.mxu0 0.0
    %427 = vmatpush1.msra.mxu0 %v149
    %428 = vmatprep.subr.mxu0 0.0
    %429 = vmatpush1.msra.mxu0 %v150
    %430 = vmatprep.subr.mxu0 0.0
    %431 = vmatpush1.msra.mxu0 %v151
    %432 = vmatprep.mubr.f32.mxu0 %v218
    %433 = vmatmul.mubr.f32.gmra.mrb[0].mxu0 %v210
    %v434 = vpop.f32.mrb[0].mxu0
    %v435 = vadd.f32 %v365, %v434
    %v436 = vpop.f32.mrb[0].mxu0
    %437 = vdwg.mxu0
    %438 = vmatprep.subr.mxu0 0.0
    %439 = vmatpush1.msra.mxu0 %v152
    %440 = vmatprep.subr.mxu0 0.0
    %441 = vmatpush1.msra.mxu0 %v153
    %442 = vmatprep.subr.mxu0 0.0
    %443 = vmatpush1.msra.mxu0 %v154
    %444 = vmatprep.subr.mxu0 0.0
    %445 = vmatpush1.msra.mxu0 %v155
    %446 = vmatprep.subr.mxu0 0.0
    %447 = vmatpush1.msra.mxu0 %v156
    %448 = vmatprep.subr.mxu0 0.0
    %449 = vmatpush1.msra.mxu0 %v157
    %450 = vmatprep.subr.mxu0 0.0
    %451 = vmatpush1.msra.mxu0 %v158
    %452 = vmatprep.subr.mxu0 0.0
    %453 = vmatpush1.msra.mxu0 %v159
    %454 = vmatprep.subr.mxu0 0.0
    %455 = vmatpush1.msra.mxu0 %v160
    %456 = vmatprep.subr.mxu0 0.0
    %457 = vmatpush1.msra.mxu0 %v161
    %458 = vmatprep.subr.mxu0 0.0
    %459 = vmatpush1.msra.mxu0 %v162
    %460 = vmatprep.subr.mxu0 0.0
    %461 = vmatpush1.msra.mxu0 %v163
    %462 = vmatprep.subr.mxu0 0.0
    %463 = vmatpush1.msra.mxu0 %v164
    %464 = vmatprep.subr.mxu0 0.0
    %465 = vmatpush1.msra.mxu0 %v165
    %466 = vmatprep.subr.mxu0 0.0
    %467 = vmatpush1.msra.mxu0 %v166
    %468 = vmatprep.subr.mxu0 0.0
    %469 = vmatpush1.msra.mxu0 %v167
    %470 = vmatprep.subr.mxu0 0.0
    %471 = vmatpush1.msra.mxu0 %v168
    %472 = vmatprep.subr.mxu0 0.0
    %473 = vmatpush1.msra.mxu0 %v169
    %474 = vmatprep.subr.mxu0 0.0
    %475 = vmatpush1.msra.mxu0 %v170
    %476 = vmatprep.subr.mxu0 0.0
    %477 = vmatpush1.msra.mxu0 %v171
    %478 = vmatprep.subr.mxu0 0.0
    %479 = vmatpush1.msra.mxu0 %v172
    %480 = vmatprep.subr.mxu0 0.0
    %481 = vmatpush1.msra.mxu0 %v173
    %482 = vmatprep.subr.mxu0 0.0
    %483 = vmatpush1.msra.mxu0 %v174
    %484 = vmatprep.subr.mxu0 0.0
    %485 = vmatpush1.msra.mxu0 %v175
    %486 = vmatprep.subr.mxu0 0.0
    %487 = vmatpush1.msra.mxu0 %v176
    %488 = vmatprep.subr.mxu0 0.0
    %489 = vmatpush1.msra.mxu0 %v177
    %490 = vmatprep.subr.mxu0 0.0
    %491 = vmatpush1.msra.mxu0 %v178
    %492 = vmatprep.subr.mxu0 0.0
    %493 = vmatpush1.msra.mxu0 %v179
    %494 = vmatprep.subr.mxu0 0.0
    %495 = vmatpush1.msra.mxu0 %v180
    %496 = vmatprep.subr.mxu0 0.0
    %497 = vmatpush1.msra.mxu0 %v181
    %498 = vmatprep.subr.mxu0 0.0
    %499 = vmatpush1.msra.mxu0 %v182
    %500 = vmatprep.subr.mxu0 0.0
    %501 = vmatpush1.msra.mxu0 %v183
    %502 = vmatprep.mubr.f32.mxu0 %v219
    %503 = vmatmul.mubr.f32.gmra.mrb[0].mxu0 %v217
    %v504 = vpop.f32.mrb[0].mxu0
    %v505 = vadd.f32 %v435, %v504
    %v506 = vpop.f32.mrb[0].mxu0
    %507 = vdwg.mxu0
    %v508 = vmax.f32 %v505, 0.0
    %v509 = vld [vmem:[#allocation7] sm:$0xff]
    %v510 = vld [vmem:[#allocation7 + $0x8] sm:$0xff]
    %v511 = vld [vmem:[#allocation7 + $0x10] sm:$0xff]
    %v512 = vld [vmem:[#allocation7 + $0x18] sm:$0xff]
    %v513 = vld [vmem:[#allocation7 + $0x20] sm:$0xff]
    %v514 = vld [vmem:[#allocation7 + $0x28] sm:$0xff]
    %v515 = vld [vmem:[#allocation7 + $0x30] sm:$0xff]
    %v516 = vld [vmem:[#allocation7 + $0x38] sm:$0xff]
    %v517 = vld [vmem:[#allocation7 + $0x40] sm:$0xff]
    %v518 = vld [vmem:[#allocation7 + $0x48] sm:$0xff]
    %v519 = vld [vmem:[#allocation7 + $0x50] sm:$0xff]
    %v520 = vld [vmem:[#allocation7 + $0x58] sm:$0xff]
    %v521 = vld [vmem:[#allocation7 + $0x60] sm:$0xff]
    %v522 = vld [vmem:[#allocation7 + $0x68] sm:$0xff]
    %v523 = vld [vmem:[#allocation7 + $0x70] sm:$0xff]
    %v524 = vld [vmem:[#allocation7 + $0x78] sm:$0xff]
    %525 = vmatprep.subr.mxu0 0.0
    %526 = vmatpush1.msra.mxu0 %v509
    %527 = vmatprep.subr.mxu0 0.0
    %528 = vmatpush1.msra.mxu0 %v510
    %529 = vmatprep.subr.mxu0 0.0
    %530 = vmatpush1.msra.mxu0 %v511
    %531 = vmatprep.subr.mxu0 0.0
    %532 = vmatpush1.msra.mxu0 %v512
    %533 = vmatprep.subr.mxu0 0.0
    %534 = vmatpush1.msra.mxu0 %v513
    %535 = vmatprep.subr.mxu0 0.0
    %536 = vmatpush1.msra.mxu0 %v514
    %537 = vmatprep.subr.mxu0 0.0
    %538 = vmatpush1.msra.mxu0 %v515
    %539 = vmatprep.subr.mxu0 0.0
    %540 = vmatpush1.msra.mxu0 %v516
    %541 = vmatprep.subr.mxu0 0.0
    %542 = vmatpush1.msra.mxu0 %v517
    %543 = vmatprep.subr.mxu0 0.0
    %544 = vmatpush1.msra.mxu0 %v518
    %545 = vmatprep.subr.mxu0 0.0
    %546 = vmatpush1.msra.mxu0 %v519
    %547 = vmatprep.subr.mxu0 0.0
    %548 = vmatpush1.msra.mxu0 %v520
    %549 = vmatprep.subr.mxu0 0.0
    %550 = vmatpush1.msra.mxu0 %v521
    %551 = vmatprep.subr.mxu0 0.0
    %552 = vmatpush1.msra.mxu0 %v522
    %553 = vmatprep.subr.mxu0 0.0
    %554 = vmatpush1.msra.mxu0 %v523
    %555 = vmatprep.subr.mxu0 0.0
    %556 = vmatpush1.msra.mxu0 %v524
    %557 = vmatprep.subr.mxu0 0.0
    %558 = vmatpush1.msra.mxu0 0.0
    %559 = vmatprep.subr.mxu0 0.0
    %560 = vmatpush1.msra.mxu0 0.0
    %561 = vmatprep.subr.mxu0 0.0
    %562 = vmatpush1.msra.mxu0 0.0
    %563 = vmatprep.subr.mxu0 0.0
    %564 = vmatpush1.msra.mxu0 0.0
    %565 = vmatprep.subr.mxu0 0.0
    %566 = vmatpush1.msra.mxu0 0.0
    %567 = vmatprep.subr.mxu0 0.0
    %568 = vmatpush1.msra.mxu0 0.0
    %569 = vmatprep.subr.mxu0 0.0
    %570 = vmatpush1.msra.mxu0 0.0
    %571 = vmatprep.subr.mxu0 0.0
    %572 = vmatpush1.msra.mxu0 0.0
    %573 = vmatprep.subr.mxu0 0.0
    %574 = vmatpush1.msra.mxu0 0.0
    %575 = vmatprep.subr.mxu0 0.0
    %576 = vmatpush1.msra.mxu0 0.0
    %577 = vmatprep.subr.mxu0 0.0
    %578 = vmatpush1.msra.mxu0 0.0
    %579 = vmatprep.subr.mxu0 0.0
    %580 = vmatpush1.msra.mxu0 0.0
    %581 = vmatprep.subr.mxu0 0.0
    %582 = vmatpush1.msra.mxu0 0.0
    %583 = vmatprep.subr.mxu0 0.0
    %584 = vmatpush1.msra.mxu0 0.0
    %585 = vmatprep.subr.mxu0 0.0
    %586 = vmatpush1.msra.mxu0 0.0
    %587 = vmatprep.subr.mxu0 0.0
    %588 = vmatpush1.msra.mxu0 0.0
    %589 = vmatprep.mubr.f32.mxu0 0.0
    %590 = vmatmul.mubr.f32.gmra.mrb[0].mxu0 %v508
    %v591 = vpop.f32.mrb[0].mxu0
    %v592 = vadd.f32 0.0, %v591
    %v593 = vpop.f32.mrb[0].mxu0
    %594 = vdwg.mxu0
    %595 = vst [vmem:[#allocation8] sm:$0x3] %v592
    // Predicated region
    $region26: #{tpu_custom_call.1} parent=1 // pred_check
      _
    $region27: #{tpu_custom_call.1} parent=1 // pred_check_branch
      %597 = sbr.rel (0) target = $region29
    $region28: #{tpu_custom_call.1} parent=1 // pred_region
      %s599 = ssub.s32 32, 32
      %600 = vsyncadd [#allocation4], %s599
      %s602 = sshll.u32 [#allocation8], 4
      %s603 = int_to_ptr.vmem [resolvable:$true] %s602
      %605 = dma.vmem_to_hbm [thread:$0]  %s603, 32, %s3, [#allocation4]
    $region29: #{tpu_custom_call.1} parent=1 // pred_fallthru
      _
    // Predicated region
    $region30: #{tpu_custom_call.1} parent=1 // pred_check
      _
    $region31: #{tpu_custom_call.1} parent=1 // pred_check_branch
      %607 = sbr.rel (0) target = $region33
    $region32: #{tpu_custom_call.1} parent=1 // pred_region
      %608 = dma.done [#allocation4], 32
    $region33: #{tpu_custom_call.1} parent=1 // pred_fallthru
      _
    %609 = vsyncpa [#allocation3], 1
    %610 = vsyncpa [#allocation6], 1
    %611 = vsyncpa [#allocation4], 1

</llo_original>
